<compile_context>
chip_gen: v7x
topology: tpu7x:2x2x1
jax: 0.10.0
libtpu: 0.0.40
codegen_flags: <defaults>
</compile_context>

<pallas_src>
import jax
import jax.numpy as jnp
from jax.experimental import pallas as pl
from jax.experimental.pallas import tpu as pltpu

STATE_DIM = 4
ACTION_DIM = 2
IN_DIM = STATE_DIM + ACTION_DIM   # 6
HIDDEN = 100

IN_PAD = 8      # contraction dim padded to sublane quantum
HID_PAD = 128   # hidden dim padded to lane quantum


def _round_up(x, m):
    return ((x + m - 1) // m) * m


def _mlp_kernel(xT_ref, w1T_ref, b1_ref, w2_ref, b2_ref, o_ref):
    # fc1 in transposed layout on the MXU:
    #   (HID_PAD, IN_PAD) @ (IN_PAD, BT) -> (HID_PAD, BT)
    h = jnp.dot(w1T_ref[...], xT_ref[...], preferred_element_type=jnp.float32)
    h = jnp.maximum(h + b1_ref[...], 0.0)          # bias bcast along lanes, ReLU
    # output layer on VPU + XLU (avoids a 1-wide MXU matmul):
    #   (HID_PAD, BT) * (HID_PAD, 1) -> sublane-reduce -> (1, BT)
    y = jnp.sum(h * w2_ref[...], axis=0, keepdims=True)
    o_ref[...] = y + b2_ref[...]                   # (1, BT), lane-dense store


def prepare_params(w1, b1, w2, b2):
    """One-time host-side padding / relayout of the PyTorch-equivalent params.

    w1: (IN_DIM, HIDDEN), b1: (HIDDEN,), w2: (HIDDEN, 1), b2: (1,)
    Returns kernel-layout params:
      w1T: (HID_PAD, IN_PAD), b1: (HID_PAD, 1), w2: (HID_PAD, 1), b2: (1, 1)
    Zero padding keeps the math identical (ReLU(0) * 0 contributes nothing).
    """
    in_dim, hid = w1.shape
    w1T = jnp.zeros((HID_PAD, IN_PAD), jnp.float32).at[:hid, :in_dim].set(w1.T)
    b1c = jnp.zeros((HID_PAD, 1), jnp.float32).at[:hid, 0].set(b1.reshape(-1))
    w2c = jnp.zeros((HID_PAD, 1), jnp.float32).at[:hid, 0].set(w2.reshape(-1))
    b2c = jnp.asarray(b2, jnp.float32).reshape(1, 1)
    return w1T, b1c, w2c, b2c


def net_forward(x, params, *, block_b=512):
    """x: (B, IN_DIM) float32; params from prepare_params(); returns (B, 1)."""
    w1T, b1c, w2c, b2c = params
    B, in_dim = x.shape
    assert in_dim <= IN_PAD

    # Batch tile: multiple of 128 (lane-dense output), capped at block_b.
    bt = min(block_b, _round_up(B, 128))
    b_pad = _round_up(B, bt)
    grid = (b_pad // bt,)

    # Pad batch + contraction dim, transpose so batch lives on the lane axis.
    xT = jnp.pad(x.astype(jnp.float32),
                 ((0, b_pad - B), (0, IN_PAD - in_dim))).T   # (IN_PAD, b_pad)

    out = pl.pallas_call(
        _mlp_kernel,
        out_shape=jax.ShapeDtypeStruct((1, b_pad), jnp.float32),
        grid=grid,
        in_specs=[
            pl.BlockSpec((IN_PAD, bt), lambda i: (0, i)),       # x: pipelined
            pl.BlockSpec((HID_PAD, IN_PAD), lambda i: (0, 0)),  # weights resident
            pl.BlockSpec((HID_PAD, 1), lambda i: (0, 0)),
            pl.BlockSpec((HID_PAD, 1), lambda i: (0, 0)),
            pl.BlockSpec((1, 1), lambda i: (0, 0)),
        ],
        out_specs=pl.BlockSpec((1, bt), lambda i: (0, i)),      # lane-dense out
        compiler_params=pltpu.CompilerParams(
            dimension_semantics=("parallel",)),                 # v7x megacore
    )(xT, w1T, b1c, w2c, b2c)

    # Back to the PyTorch (B, 1) layout.
    return out[0, :B].reshape(B, 1)


def init_params(key):
    """Init mirroring the PyTorch module: weights ~ N(0, 0.1),
       biases ~ U(-1/sqrt(fan_in), 1/sqrt(fan_in)) (nn.Linear default bias)."""
    k1, k2, k3, k4 = jax.random.split(key, 4)
    w1 = 0.1 * jax.random.normal(k1, (IN_DIM, HIDDEN), jnp.float32)
    b1_bound = 1.0 / jnp.sqrt(jnp.float32(IN_DIM))
    b1 = jax.random.uniform(k2, (HIDDEN,), jnp.float32, -b1_bound, b1_bound)
    w2 = 0.1 * jax.random.normal(k3, (HIDDEN, 1), jnp.float32)
    b2_bound = 1.0 / jnp.sqrt(jnp.float32(HIDDEN))
    b2 = jax.random.uniform(k4, (1,), jnp.float32, -b2_bound, b2_bound)
    return w1, b1, w2, b2


if __name__ == "__main__":
    key = jax.random.PRNGKey(0)
    kx, kp = jax.random.split(key)

    B = 8
    x = jax.random.normal(kx, (B, IN_DIM), jnp.float32)
    w1, b1, w2, b2 = init_params(kp)
    params = prepare_params(w1, b1, w2, b2)   # pad/relayout once, host-side

    out = jax.block_until_ready(net_forward(x, params))

    # Reference in plain JAX (same math as the PyTorch forward, unpadded).
    ref = jnp.maximum(x @ w1 + b1[None, :], 0.0) @ w2 + b2
    assert out.shape == (B, 1)
    assert jnp.allclose(out, ref, atol=1e-5, rtol=1e-5)

    print("KERNEL_OK")
</pallas_src>

<mosaic_0001>
module attributes {stable_mosaic.version = 11 : i64} {
  func.func @_mlp_kernel(%arg0: i32, %arg1: memref<8x128xf32, #tpu.memory_space<vmem>>, %arg2: memref<128x8xf32, #tpu.memory_space<vmem>>, %arg3: memref<128x1xf32, #tpu.memory_space<vmem>>, %arg4: memref<128x1xf32, #tpu.memory_space<vmem>>, %arg5: memref<1x1xf32, #tpu.memory_space<vmem>>, %arg6: memref<1x128xf32, #tpu.memory_space<vmem>>) attributes {dimension_semantics = [#tpu.dimension_semantics<parallel>], iteration_bounds = array<i64: 1>, scalar_prefetch = 0 : i64, scratch_operands = 0 : i64, tpu.core_type = #tpu.core_type<tc>, window_params = [{transform_indices = @transform_0, window_bounds = array<i64: 8, 128>}, {pipeline_mode = #tpu.pipeline_mode<synchronous>, transform_indices = @transform_1, window_bounds = array<i64: 128, 8>}, {pipeline_mode = #tpu.pipeline_mode<synchronous>, transform_indices = @transform_2, window_bounds = array<i64: 128, 1>}, {pipeline_mode = #tpu.pipeline_mode<synchronous>, transform_indices = @transform_3, window_bounds = array<i64: 128, 1>}, {pipeline_mode = #tpu.pipeline_mode<synchronous>, transform_indices = @transform_4, window_bounds = array<i64: 1, 1>}, {transform_indices = @transform_5, window_bounds = array<i64: 1, 128>}]} {
    %c0 = arith.constant 0 : index
    %c0_0 = arith.constant 0 : index
    %0 = vector.load %arg2[%c0, %c0_0] : memref<128x8xf32, #tpu.memory_space<vmem>>, vector<128x8xf32>
    %c0_1 = arith.constant 0 : index
    %c0_2 = arith.constant 0 : index
    %1 = vector.load %arg1[%c0_1, %c0_2] : memref<8x128xf32, #tpu.memory_space<vmem>>, vector<8x128xf32>
    %cst = arith.constant dense<0.000000e+00> : vector<128x128xf32>
    %2 = tpu.matmul %0, %1, %cst {dimension_numbers = #tpu.dot_dimension_numbers<[1], [0], [0], [1], [0, 0, 1, 1], [], []>} : vector<128x8xf32>, vector<8x128xf32>, vector<128x128xf32> -> vector<128x128xf32>
    %c0_3 = arith.constant 0 : index
    %c0_4 = arith.constant 0 : index
    %3 = vector.load %arg3[%c0_3, %c0_4] : memref<128x1xf32, #tpu.memory_space<vmem>>, vector<128x1xf32>
    %4 = vector.broadcast %3 : vector<128x1xf32> to vector<128x128xf32>
    %5 = arith.addf %2, %4 : vector<128x128xf32>
    %cst_5 = arith.constant 0.000000e+00 : f32
    %6 = vector.broadcast %cst_5 : f32 to vector<128x128xf32>
    %7 = arith.maximumf %5, %6 : vector<128x128xf32>
    %c0_6 = arith.constant 0 : index
    %c0_7 = arith.constant 0 : index
    %8 = vector.load %arg4[%c0_6, %c0_7] : memref<128x1xf32, #tpu.memory_space<vmem>>, vector<128x1xf32>
    %9 = vector.broadcast %8 : vector<128x1xf32> to vector<128x128xf32>
    %10 = arith.mulf %7, %9 : vector<128x128xf32>
    %cst_8 = arith.constant dense<0.000000e+00> : vector<128xf32>
    %11 = vector.multi_reduction <add>, %10, %cst_8 [0] : vector<128x128xf32> to vector<128xf32>
    %12 = vector.shape_cast %11 : vector<128xf32> to vector<1x128xf32>
    %c0_9 = arith.constant 0 : index
    %c0_10 = arith.constant 0 : index
    %13 = vector.load %arg5[%c0_9, %c0_10] : memref<1x1xf32, #tpu.memory_space<vmem>>, vector<1x1xf32>
    %14 = vector.broadcast %13 : vector<1x1xf32> to vector<1x128xf32>
    %15 = arith.addf %12, %14 : vector<1x128xf32>
    %c0_11 = arith.constant 0 : index
    %c0_12 = arith.constant 0 : index
    %16 = vector.load %arg6[%c0_11, %c0_12] : memref<1x128xf32, #tpu.memory_space<vmem>>, vector<1x128xf32>
    tpu.vector_store %arg6[%c0_11, %c0_12], %15 {strides = array<i32>} : memref<1x128xf32, #tpu.memory_space<vmem>>, vector<1x128xf32>,
    return
  }
  func.func @transform_0(%arg0: i32) -> (i32, i32) {
    %c0_i32 = arith.constant 0 : i32
    %c0_i32_0 = arith.constant 0 : i32
    return %c0_i32, %arg0 : i32, i32
  }
  func.func @transform_1(%arg0: i32) -> (i32, i32) {
    %c0_i32 = arith.constant 0 : i32
    %c0_i32_0 = arith.constant 0 : i32
    %c0_i32_1 = arith.constant 0 : i32
    return %c0_i32, %c0_i32_0 : i32, i32
  }
  func.func @transform_2(%arg0: i32) -> (i32, i32) {
    %c0_i32 = arith.constant 0 : i32
    %c0_i32_0 = arith.constant 0 : i32
    %c0_i32_1 = arith.constant 0 : i32
    return %c0_i32, %c0_i32_0 : i32, i32
  }
  func.func @transform_3(%arg0: i32) -> (i32, i32) {
    %c0_i32 = arith.constant 0 : i32
    %c0_i32_0 = arith.constant 0 : i32
    %c0_i32_1 = arith.constant 0 : i32
    return %c0_i32, %c0_i32_0 : i32, i32
  }
  func.func @transform_4(%arg0: i32) -> (i32, i32) {
    %c0_i32 = arith.constant 0 : i32
    %c0_i32_0 = arith.constant 0 : i32
    %c0_i32_1 = arith.constant 0 : i32
    return %c0_i32, %c0_i32_0 : i32, i32
  }
  func.func @transform_5(%arg0: i32) -> (i32, i32) {
    %c0_i32 = arith.constant 0 : i32
    %c0_i32_0 = arith.constant 0 : i32
    return %c0_i32, %arg0 : i32, i32
  }
}

</mosaic_0001>

<llo_original>
// kernel: tpu_custom_call.1
$region0: #{tpu_custom_call.1}
  #allocation0 [shape = 'u32[]', space=smem, size = 0x4, offset = 0x4, fixed_abs, tag = 'smem constant byte address 0x4 - core index']
  #allocation1 [shape = 'u32[144,128]{1,0:T(1,128)}', space=vmem, size = 0x12000, scoped, tag = 'internal scratch']
  #allocation2 [shape = 'f32[1,1]{1,0:T(1,128)S(1)}', space=vmem, size = 0x200, scoped, tag = 'scoped memory for tpu_custom_call.1']
  %s0 = inlined_call_operand.vmem [shape: f32[8,128], index: 0, kind: input, shape index: {}]
  %s1 = inlined_call_operand.vmem [shape: f32[128,8], index: 1, kind: input, shape index: {}]
  %s2 = inlined_call_operand.vmem [shape: f32[128,1], index: 2, kind: input, shape index: {}]
  %s3 = inlined_call_operand.vmem [shape: f32[128,1], index: 3, kind: input, shape index: {}]
  %s4 = inlined_call_operand.<no memory space> [shape: f32[1,1], index: 4, kind: input, shape index: {}]
  %s5 = inlined_call_operand.hbm [shape: f32[1,128], index: 5, kind: output, shape index: {}]
  %s6 = sld [smem:[#allocation0]]
  $region30: #{tpu_custom_call.1} parent=0
    _
  %s8 = ssub.s32 1, %s6
  %s9 = scalar_select 0, %s8, %s6
  %v10 = vstv %s4
  %11 = vst [vmem:[#allocation2] sm:$0x1] %v10
  $region1: #{tpu_custom_call.1} parent=0
    #allocation3 [shape = 'u8[512]{0}', space=vmem, size = 0x400, scoped, tag = 'output window, operand 0, single buffered']
    #allocation4 [shape = 's32[1]{0}', space=sflag, size = 0x4, scoped, tag = 'scoped memory for tpu_custom_call.1']
    %12 = vsyncpa [#allocation4], 0
    // Predicated region
    $region2: #{tpu_custom_call.1} parent=1 // pred_check
      _
    $region3: #{tpu_custom_call.1} parent=1 // pred_check_branch
      %14 = sbr.rel (0) target = $region5
    $region4: #{tpu_custom_call.1} parent=1 // pred_region
      _
    $region5: #{tpu_custom_call.1} parent=1 // pred_fallthru
      _
    // Predicated region
    $region6: #{tpu_custom_call.1} parent=1 // pred_check
      _
    $region7: #{tpu_custom_call.1} parent=1 // pred_check_branch
      %16 = sbr.rel (0) target = $region9
    $region8: #{tpu_custom_call.1} parent=1 // pred_region
      _
    $region9: #{tpu_custom_call.1} parent=1 // pred_fallthru
      _
    // Predicated region
    $region10: #{tpu_custom_call.1} parent=1 // pred_check
      _
    $region11: #{tpu_custom_call.1} parent=1 // pred_check_branch
      %18 = sbr.rel (0) target = $region13
    $region12: #{tpu_custom_call.1} parent=1 // pred_region
      _
    $region13: #{tpu_custom_call.1} parent=1 // pred_fallthru
      _
    // Predicated region
    $region14: #{tpu_custom_call.1} parent=1 // pred_check
      _
    $region15: #{tpu_custom_call.1} parent=1 // pred_check_branch
      %20 = sbr.rel (0) target = $region17
    $region16: #{tpu_custom_call.1} parent=1 // pred_region
      _
    $region17: #{tpu_custom_call.1} parent=1 // pred_fallthru
      _
    // Predicated region
    $region18: #{tpu_custom_call.1} parent=1 // pred_check
      _
    $region19: #{tpu_custom_call.1} parent=1 // pred_check_branch
      %22 = sbr.rel (0) target = $region21
    $region20: #{tpu_custom_call.1} parent=1 // pred_region
      _
    $region21: #{tpu_custom_call.1} parent=1 // pred_fallthru
      _
    %v23 = vld [vmem:[%s1] sm:$0xff]
    %v24 = vld [vmem:[%s1 + $0x8] sm:$0xff]
    %v25 = vld [vmem:[%s1 + $0x10] sm:$0xff]
    %v26 = vld [vmem:[%s1 + $0x18] sm:$0xff]
    %v27 = vld [vmem:[%s1 + $0x20] sm:$0xff]
    %v28 = vld [vmem:[%s1 + $0x28] sm:$0xff]
    %v29 = vld [vmem:[%s1 + $0x30] sm:$0xff]
    %v30 = vld [vmem:[%s1 + $0x38] sm:$0xff]
    %v31 = vld [vmem:[%s1 + $0x40] sm:$0xff]
    %v32 = vld [vmem:[%s1 + $0x48] sm:$0xff]
    %v33 = vld [vmem:[%s1 + $0x50] sm:$0xff]
    %v34 = vld [vmem:[%s1 + $0x58] sm:$0xff]
    %v35 = vld [vmem:[%s1 + $0x60] sm:$0xff]
    %v36 = vld [vmem:[%s1 + $0x68] sm:$0xff]
    %v37 = vld [vmem:[%s1 + $0x70] sm:$0xff]
    %v38 = vld [vmem:[%s1 + $0x78] sm:$0xff]
    %v39 = vld [vmem:[%s0] sm:$0xff]
    %v40 = vld [vmem:[%s2] sm:$0xff]
    %v41 = vld [vmem:[%s2 + $0x8] sm:$0xff]
    %v42 = vld [vmem:[%s2 + $0x10] sm:$0xff]
    %v43 = vld [vmem:[%s2 + $0x18] sm:$0xff]
    %v44 = vld [vmem:[%s2 + $0x20] sm:$0xff]
    %v45 = vld [vmem:[%s2 + $0x28] sm:$0xff]
    %v46 = vld [vmem:[%s2 + $0x30] sm:$0xff]
    %v47 = vld [vmem:[%s2 + $0x38] sm:$0xff]
    %v48 = vld [vmem:[%s2 + $0x40] sm:$0xff]
    %v49 = vld [vmem:[%s2 + $0x48] sm:$0xff]
    %v50 = vld [vmem:[%s2 + $0x50] sm:$0xff]
    %v51 = vld [vmem:[%s2 + $0x58] sm:$0xff]
    %v52 = vld [vmem:[%s2 + $0x60] sm:$0xff]
    %v53 = vld [vmem:[%s2 + $0x68] sm:$0xff]
    %v54 = vld [vmem:[%s2 + $0x70] sm:$0xff]
    %v55 = vld [vmem:[%s2 + $0x78] sm:$0xff]
    %57 = vset.pattern.permute.xlu0 0
    %58 = vperm.xlu0 %57, %v40
    %v59 = vpop.permute.xlu0 %58
    %62 = vset.pattern.permute.xlu0 0
    %63 = vperm.xlu0 %62, %v41
    %v64 = vpop.permute.xlu0 %63
    %67 = vset.pattern.permute.xlu0 0
    %68 = vperm.xlu0 %67, %v42
    %v69 = vpop.permute.xlu0 %68
    %72 = vset.pattern.permute.xlu0 0
    %73 = vperm.xlu0 %72, %v43
    %v74 = vpop.permute.xlu0 %73
    %77 = vset.pattern.permute.xlu0 0
    %78 = vperm.xlu0 %77, %v44
    %v79 = vpop.permute.xlu0 %78
    %82 = vset.pattern.permute.xlu0 0
    %83 = vperm.xlu0 %82, %v45
    %v84 = vpop.permute.xlu0 %83
    %87 = vset.pattern.permute.xlu0 0
    %88 = vperm.xlu0 %87, %v46
    %v89 = vpop.permute.xlu0 %88
    %92 = vset.pattern.permute.xlu0 0
    %93 = vperm.xlu0 %92, %v47
    %v94 = vpop.permute.xlu0 %93
    %97 = vset.pattern.permute.xlu0 0
    %98 = vperm.xlu0 %97, %v48
    %v99 = vpop.permute.xlu0 %98
    %102 = vset.pattern.permute.xlu0 0
    %103 = vperm.xlu0 %102, %v49
    %v104 = vpop.permute.xlu0 %103
    %107 = vset.pattern.permute.xlu0 0
    %108 = vperm.xlu0 %107, %v50
    %v109 = vpop.permute.xlu0 %108
    %112 = vset.pattern.permute.xlu0 0
    %113 = vperm.xlu0 %112, %v51
    %v114 = vpop.permute.xlu0 %113
    %117 = vset.pattern.permute.xlu0 0
    %118 = vperm.xlu0 %117, %v52
    %v119 = vpop.permute.xlu0 %118
    %122 = vset.pattern.permute.xlu0 0
    %123 = vperm.xlu0 %122, %v53
    %v124 = vpop.permute.xlu0 %123
    %127 = vset.pattern.permute.xlu0 0
    %128 = vperm.xlu0 %127, %v54
    %v129 = vpop.permute.xlu0 %128
    %132 = vset.pattern.permute.xlu0 0
    %133 = vperm.xlu0 %132, %v55
    %v134 = vpop.permute.xlu0 %133
    %vm136 = vcmask 64512
    %v138 = vsel %vm136, %v23, 0
    %v141 = vsel %vm136, %v24, 0
    %v144 = vsel %vm136, %v25, 0
    %v147 = vsel %vm136, %v26, 0
    %v150 = vsel %vm136, %v27, 0
    %v153 = vsel %vm136, %v28, 0
    %v156 = vsel %vm136, %v29, 0
    %v159 = vsel %vm136, %v30, 0
    %v162 = vsel %vm136, %v31, 0
    %v165 = vsel %vm136, %v32, 0
    %v168 = vsel %vm136, %v33, 0
    %v171 = vsel %vm136, %v34, 0
    %v174 = vsel %vm136, %v35, 0
    %v177 = vsel %vm136, %v36, 0
    %v180 = vsel %vm136, %v37, 0
    %v183 = vsel %vm136, %v38, 0
    %185 = vmatprep.subr.mxu0 0.0
    %186 = vmatpush1.msra.mxu0 %v39
    %187 = vmatprep.subr.mxu0 0.0
    %188 = vmatpush1.msra.mxu0 0.0
    %189 = vmatprep.subr.mxu0 0.0
    %190 = vmatpush1.msra.mxu0 0.0
    %191 = vmatprep.subr.mxu0 0.0
    %192 = vmatpush1.msra.mxu0 0.0
    %193 = vmatprep.subr.mxu0 0.0
    %194 = vmatpush1.msra.mxu0 0.0
    %195 = vmatprep.subr.mxu0 0.0
    %196 = vmatpush1.msra.mxu0 0.0
    %197 = vmatprep.subr.mxu0 0.0
    %198 = vmatpush1.msra.mxu0 0.0
    %199 = vmatprep.subr.mxu0 0.0
    %200 = vmatpush1.msra.mxu0 0.0
    %201 = vmatprep.subr.mxu0 0.0
    %202 = vmatpush1.msra.mxu0 0.0
    %203 = vmatprep.subr.mxu0 0.0
    %204 = vmatpush1.msra.mxu0 0.0
    %205 = vmatprep.subr.mxu0 0.0
    %206 = vmatpush1.msra.mxu0 0.0
    %207 = vmatprep.subr.mxu0 0.0
    %208 = vmatpush1.msra.mxu0 0.0
    %209 = vmatprep.subr.mxu0 0.0
    %210 = vmatpush1.msra.mxu0 0.0
    %211 = vmatprep.subr.mxu0 0.0
    %212 = vmatpush1.msra.mxu0 0.0
    %213 = vmatprep.subr.mxu0 0.0
    %214 = vmatpush1.msra.mxu0 0.0
    %215 = vmatprep.subr.mxu0 0.0
    %216 = vmatpush1.msra.mxu0 0.0
    %217 = vmatprep.subr.mxu0 0.0
    %218 = vmatpush1.msra.mxu0 0.0
    %219 = vmatprep.subr.mxu0 0.0
    %220 = vmatpush1.msra.mxu0 0.0
    %221 = vmatprep.subr.mxu0 0.0
    %222 = vmatpush1.msra.mxu0 0.0
    %223 = vmatprep.subr.mxu0 0.0
    %224 = vmatpush1.msra.mxu0 0.0
    %225 = vmatprep.subr.mxu0 0.0
    %226 = vmatpush1.msra.mxu0 0.0
    %227 = vmatprep.subr.mxu0 0.0
    %228 = vmatpush1.msra.mxu0 0.0
    %229 = vmatprep.subr.mxu0 0.0
    %230 = vmatpush1.msra.mxu0 0.0
    %231 = vmatprep.subr.mxu0 0.0
    %232 = vmatpush1.msra.mxu0 0.0
    %233 = vmatprep.subr.mxu0 0.0
    %234 = vmatpush1.msra.mxu0 0.0
    %235 = vmatprep.subr.mxu0 0.0
    %236 = vmatpush1.msra.mxu0 0.0
    %237 = vmatprep.subr.mxu0 0.0
    %238 = vmatpush1.msra.mxu0 0.0
    %239 = vmatprep.subr.mxu0 0.0
    %240 = vmatpush1.msra.mxu0 0.0
    %241 = vmatprep.subr.mxu0 0.0
    %242 = vmatpush1.msra.mxu0 0.0
    %243 = vmatprep.subr.mxu0 0.0
    %244 = vmatpush1.msra.mxu0 0.0
    %245 = vmatprep.subr.mxu0 0.0
    %246 = vmatpush1.msra.mxu0 0.0
    %247 = vmatprep.subr.mxu0 0.0
    %248 = vmatpush1.msra.mxu0 0.0
    %249 = vmatprep.mubr.f32.mxu0 0.0
    %250 = vmatmul.mubr.f32.gmra.mrb[0].mxu0 %v138
    %v251 = vpop.f32.mrb[0].mxu0
    %v252 = vadd.f32 %v59, %v251
    %v253 = vpop.f32.mrb[0].mxu0
    %254 = vmatprep.mubr.f32.mxu0 0.0
    %255 = vmatmul.mubr.f32.gmra.mrb[0].mxu0 %v141
    %v256 = vpop.f32.mrb[0].mxu0
    %v257 = vadd.f32 %v64, %v256
    %v258 = vpop.f32.mrb[0].mxu0
    %259 = vmatprep.mubr.f32.mxu0 0.0
    %260 = vmatmul.mubr.f32.gmra.mrb[0].mxu0 %v144
    %v261 = vpop.f32.mrb[0].mxu0
    %v262 = vadd.f32 %v69, %v261
    %v263 = vpop.f32.mrb[0].mxu0
    %264 = vmatprep.mubr.f32.mxu0 0.0
    %265 = vmatmul.mubr.f32.gmra.mrb[0].mxu0 %v147
    %v266 = vpop.f32.mrb[0].mxu0
    %v267 = vadd.f32 %v74, %v266
    %v268 = vpop.f32.mrb[0].mxu0
    %269 = vmatprep.mubr.f32.mxu0 0.0
    %270 = vmatmul.mubr.f32.gmra.mrb[0].mxu0 %v150
    %v271 = vpop.f32.mrb[0].mxu0
    %v272 = vadd.f32 %v79, %v271
    %v273 = vpop.f32.mrb[0].mxu0
    %274 = vmatprep.mubr.f32.mxu0 0.0
    %275 = vmatmul.mubr.f32.gmra.mrb[0].mxu0 %v153
    %v276 = vpop.f32.mrb[0].mxu0
    %v277 = vadd.f32 %v84, %v276
    %v278 = vpop.f32.mrb[0].mxu0
    %279 = vmatprep.mubr.f32.mxu0 0.0
    %280 = vmatmul.mubr.f32.gmra.mrb[0].mxu0 %v156
    %v281 = vpop.f32.mrb[0].mxu0
    %v282 = vadd.f32 %v89, %v281
    %v283 = vpop.f32.mrb[0].mxu0
    %284 = vmatprep.mubr.f32.mxu0 0.0
    %285 = vmatmul.mubr.f32.gmra.mrb[0].mxu0 %v159
    %v286 = vpop.f32.mrb[0].mxu0
    %v287 = vadd.f32 %v94, %v286
    %v288 = vpop.f32.mrb[0].mxu0
    %289 = vmatprep.mubr.f32.mxu0 0.0
    %290 = vmatmul.mubr.f32.gmra.mrb[0].mxu0 %v162
    %v291 = vpop.f32.mrb[0].mxu0
    %v292 = vadd.f32 %v99, %v291
    %v293 = vpop.f32.mrb[0].mxu0
    %294 = vmatprep.mubr.f32.mxu0 0.0
    %295 = vmatmul.mubr.f32.gmra.mrb[0].mxu0 %v165
    %v296 = vpop.f32.mrb[0].mxu0
    %v297 = vadd.f32 %v104, %v296
    %v298 = vpop.f32.mrb[0].mxu0
    %299 = vmatprep.mubr.f32.mxu0 0.0
    %300 = vmatmul.mubr.f32.gmra.mrb[0].mxu0 %v168
    %v301 = vpop.f32.mrb[0].mxu0
    %v302 = vadd.f32 %v109, %v301
    %v303 = vpop.f32.mrb[0].mxu0
    %304 = vmatprep.mubr.f32.mxu0 0.0
    %305 = vmatmul.mubr.f32.gmra.mrb[0].mxu0 %v171
    %v306 = vpop.f32.mrb[0].mxu0
    %v307 = vadd.f32 %v114, %v306
    %v308 = vpop.f32.mrb[0].mxu0
    %309 = vmatprep.mubr.f32.mxu0 0.0
    %310 = vmatmul.mubr.f32.gmra.mrb[0].mxu0 %v174
    %v311 = vpop.f32.mrb[0].mxu0
    %v312 = vadd.f32 %v119, %v311
    %v313 = vpop.f32.mrb[0].mxu0
    %314 = vmatprep.mubr.f32.mxu0 0.0
    %315 = vmatmul.mubr.f32.gmra.mrb[0].mxu0 %v177
    %v316 = vpop.f32.mrb[0].mxu0
    %v317 = vadd.f32 %v124, %v316
    %v318 = vpop.f32.mrb[0].mxu0
    %319 = vmatprep.mubr.f32.mxu0 0.0
    %320 = vmatmul.mubr.f32.gmra.mrb[0].mxu0 %v180
    %v321 = vpop.f32.mrb[0].mxu0
    %v322 = vadd.f32 %v129, %v321
    %v323 = vpop.f32.mrb[0].mxu0
    %324 = vmatprep.mubr.f32.mxu0 0.0
    %325 = vmatmul.mubr.f32.gmra.mrb[0].mxu0 %v183
    %v326 = vpop.f32.mrb[0].mxu0
    %v327 = vadd.f32 %v134, %v326
    %v328 = vpop.f32.mrb[0].mxu0
    %329 = vdwg.mxu0
    %v330 = vmax.f32 %v252, 0.0
    %v331 = vmax.f32 %v257, 0.0
    %v332 = vmax.f32 %v262, 0.0
    %v333 = vmax.f32 %v267, 0.0
    %v334 = vmax.f32 %v272, 0.0
    %v335 = vmax.f32 %v277, 0.0
    %v336 = vmax.f32 %v282, 0.0
    %v337 = vmax.f32 %v287, 0.0
    %v338 = vmax.f32 %v292, 0.0
    %v339 = vmax.f32 %v297, 0.0
    %v340 = vmax.f32 %v302, 0.0
    %v341 = vmax.f32 %v307, 0.0
    %v342 = vmax.f32 %v312, 0.0
    %v343 = vmax.f32 %v317, 0.0
    %v344 = vmax.f32 %v322, 0.0
    %v345 = vmax.f32 %v327, 0.0
    %v346 = vld [vmem:[%s3] sm:$0xff]
    %v347 = vld [vmem:[%s3 + $0x8] sm:$0xff]
    %v348 = vld [vmem:[%s3 + $0x10] sm:$0xff]
    %v349 = vld [vmem:[%s3 + $0x18] sm:$0xff]
    %v350 = vld [vmem:[%s3 + $0x20] sm:$0xff]
    %v351 = vld [vmem:[%s3 + $0x28] sm:$0xff]
    %v352 = vld [vmem:[%s3 + $0x30] sm:$0xff]
    %v353 = vld [vmem:[%s3 + $0x38] sm:$0xff]
    %v354 = vld [vmem:[%s3 + $0x40] sm:$0xff]
    %v355 = vld [vmem:[%s3 + $0x48] sm:$0xff]
    %v356 = vld [vmem:[%s3 + $0x50] sm:$0xff]
    %v357 = vld [vmem:[%s3 + $0x58] sm:$0xff]
    %v358 = vld [vmem:[%s3 + $0x60] sm:$0xff]
    %v359 = vld [vmem:[%s3 + $0x68] sm:$0xff]
    %v360 = vld [vmem:[%s3 + $0x70] sm:$0xff]
    %v361 = vld [vmem:[%s3 + $0x78] sm:$0xff]
    %363 = vset.pattern.permute.xlu0 0
    %364 = vperm.xlu0 %363, %v346
    %v365 = vpop.permute.xlu0 %364
    %368 = vset.pattern.permute.xlu0 0
    %369 = vperm.xlu0 %368, %v347
    %v370 = vpop.permute.xlu0 %369
    %373 = vset.pattern.permute.xlu0 0
    %374 = vperm.xlu0 %373, %v348
    %v375 = vpop.permute.xlu0 %374
    %378 = vset.pattern.permute.xlu0 0
    %379 = vperm.xlu0 %378, %v349
    %v380 = vpop.permute.xlu0 %379
    %383 = vset.pattern.permute.xlu0 0
    %384 = vperm.xlu0 %383, %v350
    %v385 = vpop.permute.xlu0 %384
    %388 = vset.pattern.permute.xlu0 0
    %389 = vperm.xlu0 %388, %v351
    %v390 = vpop.permute.xlu0 %389
    %393 = vset.pattern.permute.xlu0 0
    %394 = vperm.xlu0 %393, %v352
    %v395 = vpop.permute.xlu0 %394
    %398 = vset.pattern.permute.xlu0 0
    %399 = vperm.xlu0 %398, %v353
    %v400 = vpop.permute.xlu0 %399
    %403 = vset.pattern.permute.xlu0 0
    %404 = vperm.xlu0 %403, %v354
    %v405 = vpop.permute.xlu0 %404
    %408 = vset.pattern.permute.xlu0 0
    %409 = vperm.xlu0 %408, %v355
    %v410 = vpop.permute.xlu0 %409
    %413 = vset.pattern.permute.xlu0 0
    %414 = vperm.xlu0 %413, %v356
    %v415 = vpop.permute.xlu0 %414
    %418 = vset.pattern.permute.xlu0 0
    %419 = vperm.xlu0 %418, %v357
    %v420 = vpop.permute.xlu0 %419
    %423 = vset.pattern.permute.xlu0 0
    %424 = vperm.xlu0 %423, %v358
    %v425 = vpop.permute.xlu0 %424
    %428 = vset.pattern.permute.xlu0 0
    %429 = vperm.xlu0 %428, %v359
    %v430 = vpop.permute.xlu0 %429
    %433 = vset.pattern.permute.xlu0 0
    %434 = vperm.xlu0 %433, %v360
    %v435 = vpop.permute.xlu0 %434
    %438 = vset.pattern.permute.xlu0 0
    %439 = vperm.xlu0 %438, %v361
    %v440 = vpop.permute.xlu0 %439
    %v442 = vmul.f32 %v330, %v365
    %v443 = vmul.f32 %v331, %v370
    %v444 = vmul.f32 %v332, %v375
    %v445 = vmul.f32 %v333, %v380
    %v446 = vmul.f32 %v334, %v385
    %v447 = vmul.f32 %v335, %v390
    %v448 = vmul.f32 %v336, %v395
    %v449 = vmul.f32 %v337, %v400
    %v450 = vmul.f32 %v338, %v405
    %v451 = vmul.f32 %v339, %v410
    %v452 = vmul.f32 %v340, %v415
    %v453 = vmul.f32 %v341, %v420
    %v454 = vmul.f32 %v342, %v425
    %v455 = vmul.f32 %v343, %v430
    %v456 = vmul.f32 %v344, %v435
    %v457 = vmul.f32 %v345, %v440
    %v458 = vadd.f32 %v442, %v443
    %v459 = vadd.f32 %v458, %v444
    %v460 = vadd.f32 %v459, %v445
    %v461 = vadd.f32 %v460, %v446
    %v462 = vadd.f32 %v461, %v447
    %v463 = vadd.f32 %v462, %v448
    %v464 = vadd.f32 %v463, %v449
    %v465 = vadd.f32 %v464, %v450
    %v466 = vadd.f32 %v465, %v451
    %v467 = vadd.f32 %v466, %v452
    %v468 = vadd.f32 %v467, %v453
    %v469 = vadd.f32 %v468, %v454
    %v470 = vadd.f32 %v469, %v455
    %v471 = vadd.f32 %v470, %v456
    %v472 = vadd.f32 %v471, %v457
    %v473 = vrot.slane %v472, 4
    %v474 = vadd.f32 %v472, %v473
    %v475 = vrot.slane %v474, 2
    %v476 = vadd.f32 %v474, %v475
    %v477 = vrot.slane %v476, 1
    %v478 = vadd.f32 %v476, %v477
    %v479 = vld [vmem:[#allocation2] sm:$0x1]
    %481 = vset.pattern.permute.xlu0 0
    %482 = vperm.xlu0 %481, %v479
    %v483 = vpop.permute.xlu0 %482
    %v485 = vlaneseq
    %v486 = vshrl.u32 %v485, 7
    %v487 = vsub.s32 0, %v486
    %v488 = vrot.slane %v483, %v487
    %v489 = vadd.f32 %v478, %v488
    %490 = vst [vmem:[#allocation3] sm:$0x1] %v489
    // Predicated region
    $region22: #{tpu_custom_call.1} parent=1 // pred_check
      _
    $region23: #{tpu_custom_call.1} parent=1 // pred_check_branch
      %492 = sbr.rel (0) target = $region25
    $region24: #{tpu_custom_call.1} parent=1 // pred_region
      %s494 = ssub.s32 16, 16
      %495 = vsyncadd [#allocation4], %s494
      %s497 = sshll.u32 [#allocation3], 4
      %s498 = int_to_ptr.vmem [resolvable:$true] %s497
      %500 = dma.vmem_to_hbm [thread:$0]  %s498, 16, %s5, [#allocation4]
    $region25: #{tpu_custom_call.1} parent=1 // pred_fallthru
      _
    // Predicated region
    $region26: #{tpu_custom_call.1} parent=1 // pred_check
      _
    $region27: #{tpu_custom_call.1} parent=1 // pred_check_branch
      %502 = sbr.rel (0) target = $region29
    $region28: #{tpu_custom_call.1} parent=1 // pred_region
      %503 = dma.done [#allocation4], 16
    $region29: #{tpu_custom_call.1} parent=1 // pred_fallthru
      _
    %504 = vsyncpa [#allocation4], 1

</llo_original>
